<compile_context>
chip_gen: v6e
topology: v6e:2x2x1
jax: 0.10.0
libtpu: 0.0.40
codegen_flags: <defaults>
</compile_context>

<pallas_src>
import math

import jax
import jax.numpy as jnp
from jax.experimental import pallas as pl
from jax.experimental.pallas import tpu as pltpu


def _round_up(n, m):
    return ((n + m - 1) // m) * m


def q_critic_kernel(xy_ref, w1_ref, b1_ref, w2_ref, b2_ref, w3_ref, b3_ref,
                    q_ref):
    """Fused 3-layer MLP for one batch tile, feature-major layout.

    xy_ref: [F, TILE_B]  packed [state; action] features (matmul dtype)
    w1_ref: [H, F]   b1_ref: [H, 1]      (w1/w2 pre-cast to matmul dtype)
    w2_ref: [H, H]   b2_ref: [H, 1]
    w3_ref: [H, 1]   b3_ref: [1, 1]      (f32; used on the VPU/XLU head)
    q_ref:  [1, TILE_B]                  (lane-dense f32 output tile)
    """
    # fc1 + relu: single dot over the packed features, f32 accumulation.
    h1 = jnp.dot(w1_ref[...], xy_ref[...],
                 preferred_element_type=jnp.float32)
    h1 = jnp.maximum(h1 + b1_ref[...], 0.0)               # [H, TILE_B] f32

    # fc2 + relu.
    h2 = jnp.dot(w2_ref[...], h1.astype(w2_ref.dtype),
                 preferred_element_type=jnp.float32)
    h2 = jnp.maximum(h2 + b2_ref[...], 0.0)               # [H, TILE_B] f32

    # state_value head: VPU broadcast-multiply + XLU sublane reduce over H
    # (avoids a third full MXU pass for an M=1 matmul); stays in f32.
    q = jnp.sum(w3_ref[...] * h2, axis=0, keepdims=True) + b3_ref[...]
    q_ref[...] = q.astype(q_ref.dtype)                    # [1, TILE_B]


def q_critic_forward(x, y, params, *, tile_b=8192, matmul_dtype=jnp.bfloat16,
                     xla_fallback_batch=256):
    """x: [B, num_state], y: [B, num_action] -> q: [B, 1] (float32)."""
    w1, b1, w2, b2, w3, b3 = params       # PyTorch layout: w [out, in], b [out]
    x = x.astype(jnp.float32)
    y = y.astype(jnp.float32)
    B, S = x.shape
    A = y.shape[1]
    H = w2.shape[0]
    F = S + A
    assert w1.shape == (H, F) and w3.shape == (1, H)

    # Tiny-batch fallback: a kernel launch is pure overhead at B ~ 4-128 and
    # XLA fusion is as fast or faster.
    if B < xla_fallback_batch:
        xy = jnp.concatenate([x, y], axis=1)
        h1 = jnp.maximum(xy @ w1.T + b1, 0.0)
        h2 = jnp.maximum(h1 @ w2.T + b2, 0.0)
        return h2 @ w3.T + b3

    md = jnp.dtype(matmul_dtype)

    # --- Layout prep (ideally done once by the producer) -------------------
    # TODO(synk): if the producer can be changed, feed [S+A, B] feature-major
    # (bf16) activations directly and drop this transpose/cast pre-pass.
    xy_t = jnp.concatenate([x, y], axis=1).T               # [F, B] feature-major
    f_pad = _round_up(F, 8)                                 # sublane-friendly K
    if f_pad != F:
        xy_t = jnp.pad(xy_t, ((0, 0), (0, 0)))              # no-op placeholder
        xy_t = jnp.pad(xy_t, ((0, f_pad - F), (0, 0)))
        w1 = jnp.pad(w1, ((0, 0), (0, f_pad - F)))
    xy_t = xy_t.astype(md)

    # Pre-cast resident weights once (keep biases + head in f32).
    w1_k = w1.astype(md)                                    # [H, f_pad]
    w2_k = w2.astype(md)                                    # [H, H]
    b1_k = b1.reshape(H, 1).astype(jnp.float32)
    b2_k = b2.reshape(H, 1).astype(jnp.float32)
    w3_k = w3.reshape(H, 1).astype(jnp.float32)             # column for VPU head
    b3_k = b3.reshape(1, 1).astype(jnp.float32)

    # --- Batch tiling -------------------------------------------------------
    # Lane-dense (multiple-of-128) tiles; single tile for small batches; even
    # tile counts for large batches so v7x's two TensorCores load-balance.
    tile_b = max(128, _round_up(tile_b, 128))
    num_tiles = max(1, -(-B // tile_b))
    if num_tiles > 1 and num_tiles % 2:
        num_tiles += 1
    tile_b = _round_up(-(-B // num_tiles), 128)
    b_pad = num_tiles * tile_b
    if b_pad != B:
        xy_t = jnp.pad(xy_t, ((0, 0), (0, b_pad - B)))

    def resident(shape):
        # Constant index_map -> block stays VMEM-resident across grid steps.
        return pl.BlockSpec(shape, lambda i: (0, 0))

    flops = 2 * b_pad * (f_pad * H + H * H + H)
    bytes_accessed = (md.itemsize * (b_pad * f_pad + f_pad * H + H * H)
                      + 4 * (b_pad + 3 * H + 1))

    q_t = pl.pallas_call(
        q_critic_kernel,
        out_shape=jax.ShapeDtypeStruct((1, b_pad), jnp.float32),
        grid=(num_tiles,),
        in_specs=[
            pl.BlockSpec((f_pad, tile_b), lambda i: (0, i)),  # packed activations
            resident(w1_k.shape),
            resident(b1_k.shape),
            resident(w2_k.shape),
            resident(b2_k.shape),
            resident(w3_k.shape),
            resident(b3_k.shape),
        ],
        out_specs=pl.BlockSpec((1, tile_b), lambda i: (0, i)),
        compiler_params=pltpu.CompilerParams(
            dimension_semantics=("parallel",)),
        cost_estimate=pl.CostEstimate(
            flops=flops, transcendentals=0, bytes_accessed=bytes_accessed),
    )(xy_t, w1_k, b1_k, w2_k, b2_k, w3_k, b3_k)

    # Padded batch columns are computed but sliced off here (do not remove).
    return q_t[:, :B].reshape(B, 1)


def init_params(key, num_state, num_action, num_hidden):
    """PyTorch nn.Linear default init (uniform +/- 1/sqrt(fan_in)).
    Weights stored [out_features, in_features]; biases [out_features]."""
    def linear(k, fan_in, fan_out):
        kw, kb = jax.random.split(k)
        bound = 1.0 / math.sqrt(fan_in)
        w = jax.random.uniform(kw, (fan_out, fan_in), jnp.float32, -bound, bound)
        b = jax.random.uniform(kb, (fan_out,), jnp.float32, -bound, bound)
        return w, b

    k1, k2, k3 = jax.random.split(key, 3)
    w1, b1 = linear(k1, num_state + num_action, num_hidden)
    w2, b2 = linear(k2, num_hidden, num_hidden)
    w3, b3 = linear(k3, num_hidden, 1)
    return (w1, b1, w2, b2, w3, b3)


def reference_forward(x, y, params):
    """Pure-JAX reference (matches the PyTorch module)."""
    w1, b1, w2, b2, w3, b3 = params
    xy = jnp.concatenate([x, y], axis=1)
    h1 = jnp.maximum(xy @ w1.T + b1, 0.0)
    h2 = jnp.maximum(h1 @ w2.T + b2, 0.0)
    return h2 @ w3.T + b3


if __name__ == "__main__":
    num_state, num_action, num_hidden = 16, 8, 32

    key = jax.random.PRNGKey(0)
    kx, ky, kp = jax.random.split(key, 3)
    params = init_params(kp, num_state, num_action, num_hidden)

    # --- Small batch, forced through the Pallas kernel (one [*, 128] tile) --
    batch = 4
    x = jax.random.normal(kx, (batch, num_state), jnp.float32)
    y = jax.random.normal(ky, (batch, num_action), jnp.float32)
    q_ref = reference_forward(x, y, params)

    q_f32 = q_critic_forward(x, y, params, matmul_dtype=jnp.float32,
                             xla_fallback_batch=0)
    q_f32 = jax.block_until_ready(q_f32)
    assert q_f32.shape == (batch, 1)
    assert jnp.allclose(q_f32, q_ref, atol=1e-3, rtol=1e-3)

    q_bf16 = q_critic_forward(x, y, params, matmul_dtype=jnp.bfloat16,
                              xla_fallback_batch=0)
    q_bf16 = jax.block_until_ready(q_bf16)
    assert q_bf16.shape == (batch, 1)
    assert jnp.allclose(q_bf16, q_ref, atol=5e-2, rtol=5e-2)

    # --- Default call routes tiny batches to the XLA fallback ---------------
    q_fb = jax.block_until_ready(q_critic_forward(x, y, params))
    assert jnp.allclose(q_fb, q_ref, atol=1e-5, rtol=1e-5)

    # --- Multi-tile grid (even tile-count split): B=384 -> 4 tiles of 128 ----
    xb = jax.random.normal(kx, (384, num_state), jnp.float32)
    yb = jax.random.normal(ky, (384, num_action), jnp.float32)
    qb_ref = reference_forward(xb, yb, params)
    qb = q_critic_forward(xb, yb, params, tile_b=128,
                          matmul_dtype=jnp.float32, xla_fallback_batch=0)
    qb = jax.block_until_ready(qb)
    assert qb.shape == (384, 1)
    assert jnp.allclose(qb, qb_ref, atol=1e-3, rtol=1e-3)

    print("KERNEL_OK")
</pallas_src>

<mosaic_0001>
module attributes {stable_mosaic.version = 11 : i64} {
  func.func @q_critic_kernel(%arg0: i32, %arg1: memref<24x128xf32, #tpu.memory_space<vmem>>, %arg2: memref<32x24xf32, #tpu.memory_space<vmem>>, %arg3: memref<32x1xf32, #tpu.memory_space<vmem>>, %arg4: memref<32x32xf32, #tpu.memory_space<vmem>>, %arg5: memref<32x1xf32, #tpu.memory_space<vmem>>, %arg6: memref<32x1xf32, #tpu.memory_space<vmem>>, %arg7: memref<1x1xf32, #tpu.memory_space<vmem>>, %arg8: memref<1x128xf32, #tpu.memory_space<vmem>>) attributes {dimension_semantics = [#tpu.dimension_semantics<parallel>], iteration_bounds = array<i64: 1>, scalar_prefetch = 0 : i64, scratch_operands = 0 : i64, tpu.core_type = #tpu.core_type<tc>, window_params = [{transform_indices = @transform_0, window_bounds = array<i64: 24, 128>}, {pipeline_mode = #tpu.pipeline_mode<synchronous>, transform_indices = @transform_1, window_bounds = array<i64: 32, 24>}, {pipeline_mode = #tpu.pipeline_mode<synchronous>, transform_indices = @transform_2, window_bounds = array<i64: 32, 1>}, {pipeline_mode = #tpu.pipeline_mode<synchronous>, transform_indices = @transform_3, window_bounds = array<i64: 32, 32>}, {pipeline_mode = #tpu.pipeline_mode<synchronous>, transform_indices = @transform_4, window_bounds = array<i64: 32, 1>}, {pipeline_mode = #tpu.pipeline_mode<synchronous>, transform_indices = @transform_5, window_bounds = array<i64: 32, 1>}, {pipeline_mode = #tpu.pipeline_mode<synchronous>, transform_indices = @transform_6, window_bounds = array<i64: 1, 1>}, {transform_indices = @transform_7, window_bounds = array<i64: 1, 128>}]} {
    %c0 = arith.constant 0 : index
    %c0_0 = arith.constant 0 : index
    %0 = vector.load %arg2[%c0, %c0_0] : memref<32x24xf32, #tpu.memory_space<vmem>>, vector<32x24xf32>
    %c0_1 = arith.constant 0 : index
    %c0_2 = arith.constant 0 : index
    %1 = vector.load %arg1[%c0_1, %c0_2] : memref<24x128xf32, #tpu.memory_space<vmem>>, vector<24x128xf32>
    %cst = arith.constant dense<0.000000e+00> : vector<32x128xf32>
    %2 = tpu.matmul %0, %1, %cst {dimension_numbers = #tpu.dot_dimension_numbers<[1], [0], [0], [1], [0, 0, 1, 1], [], []>} : vector<32x24xf32>, vector<24x128xf32>, vector<32x128xf32> -> vector<32x128xf32>
    %c0_3 = arith.constant 0 : index
    %c0_4 = arith.constant 0 : index
    %3 = vector.load %arg3[%c0_3, %c0_4] : memref<32x1xf32, #tpu.memory_space<vmem>>, vector<32x1xf32>
    %4 = vector.broadcast %3 : vector<32x1xf32> to vector<32x128xf32>
    %5 = arith.addf %2, %4 : vector<32x128xf32>
    %cst_5 = arith.constant 0.000000e+00 : f32
    %6 = vector.broadcast %cst_5 : f32 to vector<32x128xf32>
    %7 = arith.maximumf %5, %6 : vector<32x128xf32>
    %c0_6 = arith.constant 0 : index
    %c0_7 = arith.constant 0 : index
    %8 = vector.load %arg4[%c0_6, %c0_7] : memref<32x32xf32, #tpu.memory_space<vmem>>, vector<32x32xf32>
    %cst_8 = arith.constant dense<0.000000e+00> : vector<32x128xf32>
    %9 = tpu.matmul %8, %7, %cst_8 {dimension_numbers = #tpu.dot_dimension_numbers<[1], [0], [0], [1], [0, 0, 1, 1], [], []>} : vector<32x32xf32>, vector<32x128xf32>, vector<32x128xf32> -> vector<32x128xf32>
    %c0_9 = arith.constant 0 : index
    %c0_10 = arith.constant 0 : index
    %10 = vector.load %arg5[%c0_9, %c0_10] : memref<32x1xf32, #tpu.memory_space<vmem>>, vector<32x1xf32>
    %11 = vector.broadcast %10 : vector<32x1xf32> to vector<32x128xf32>
    %12 = arith.addf %9, %11 : vector<32x128xf32>
    %cst_11 = arith.constant 0.000000e+00 : f32
    %13 = vector.broadcast %cst_11 : f32 to vector<32x128xf32>
    %14 = arith.maximumf %12, %13 : vector<32x128xf32>
    %c0_12 = arith.constant 0 : index
    %c0_13 = arith.constant 0 : index
    %15 = vector.load %arg6[%c0_12, %c0_13] : memref<32x1xf32, #tpu.memory_space<vmem>>, vector<32x1xf32>
    %16 = vector.broadcast %15 : vector<32x1xf32> to vector<32x128xf32>
    %17 = arith.mulf %16, %14 : vector<32x128xf32>
    %cst_14 = arith.constant dense<0.000000e+00> : vector<128xf32>
    %18 = vector.multi_reduction <add>, %17, %cst_14 [0] : vector<32x128xf32> to vector<128xf32>
    %19 = vector.shape_cast %18 : vector<128xf32> to vector<1x128xf32>
    %c0_15 = arith.constant 0 : index
    %c0_16 = arith.constant 0 : index
    %20 = vector.load %arg7[%c0_15, %c0_16] : memref<1x1xf32, #tpu.memory_space<vmem>>, vector<1x1xf32>
    %21 = vector.broadcast %20 : vector<1x1xf32> to vector<1x128xf32>
    %22 = arith.addf %19, %21 : vector<1x128xf32>
    %c0_17 = arith.constant 0 : index
    %c0_18 = arith.constant 0 : index
    %23 = vector.load %arg8[%c0_17, %c0_18] : memref<1x128xf32, #tpu.memory_space<vmem>>, vector<1x128xf32>
    tpu.vector_store %arg8[%c0_17, %c0_18], %22 {strides = array<i32>} : memref<1x128xf32, #tpu.memory_space<vmem>>, vector<1x128xf32>,
    return
  }
  func.func @transform_0(%arg0: i32) -> (i32, i32) {
    %c0_i32 = arith.constant 0 : i32
    %c0_i32_0 = arith.constant 0 : i32
    return %c0_i32, %arg0 : i32, i32
  }
  func.func @transform_1(%arg0: i32) -> (i32, i32) {
    %c0_i32 = arith.constant 0 : i32
    %c0_i32_0 = arith.constant 0 : i32
    %c0_i32_1 = arith.constant 0 : i32
    return %c0_i32, %c0_i32_0 : i32, i32
  }
  func.func @transform_2(%arg0: i32) -> (i32, i32) {
    %c0_i32 = arith.constant 0 : i32
    %c0_i32_0 = arith.constant 0 : i32
    %c0_i32_1 = arith.constant 0 : i32
    return %c0_i32, %c0_i32_0 : i32, i32
  }
  func.func @transform_3(%arg0: i32) -> (i32, i32) {
    %c0_i32 = arith.constant 0 : i32
    %c0_i32_0 = arith.constant 0 : i32
    %c0_i32_1 = arith.constant 0 : i32
    return %c0_i32, %c0_i32_0 : i32, i32
  }
  func.func @transform_4(%arg0: i32) -> (i32, i32) {
    %c0_i32 = arith.constant 0 : i32
    %c0_i32_0 = arith.constant 0 : i32
    %c0_i32_1 = arith.constant 0 : i32
    return %c0_i32, %c0_i32_0 : i32, i32
  }
  func.func @transform_5(%arg0: i32) -> (i32, i32) {
    %c0_i32 = arith.constant 0 : i32
    %c0_i32_0 = arith.constant 0 : i32
    %c0_i32_1 = arith.constant 0 : i32
    return %c0_i32, %c0_i32_0 : i32, i32
  }
  func.func @transform_6(%arg0: i32) -> (i32, i32) {
    %c0_i32 = arith.constant 0 : i32
    %c0_i32_0 = arith.constant 0 : i32
    %c0_i32_1 = arith.constant 0 : i32
    return %c0_i32, %c0_i32_0 : i32, i32
  }
  func.func @transform_7(%arg0: i32) -> (i32, i32) {
    %c0_i32 = arith.constant 0 : i32
    %c0_i32_0 = arith.constant 0 : i32
    return %c0_i32, %arg0 : i32, i32
  }
}

</mosaic_0001>

<llo_original>
// kernel: tpu_custom_call.1
$region0: #{tpu_custom_call.1}
  #allocation0 [shape = 'u32[]', space=smem, size = 0x4, offset = 0x4, fixed_abs, tag = 'smem constant byte address 0x4 - core index']
  #allocation1 [shape = 'u32[144,128]{1,0:T(1,128)}', space=vmem, size = 0x12000, scoped, tag = 'internal scratch']
  #allocation2 [shape = 'f32[1,1]{1,0:T(1,128)S(1)}', space=vmem, size = 0x200, scoped, tag = 'scoped memory for tpu_custom_call.1']
  %s0 = inlined_call_operand.vmem [shape: f32[24,128], index: 0, kind: input, shape index: {}]
  %s1 = inlined_call_operand.vmem [shape: f32[32,24], index: 1, kind: input, shape index: {}]
  %s2 = inlined_call_operand.vmem [shape: f32[32,1], index: 2, kind: input, shape index: {}]
  %s3 = inlined_call_operand.vmem [shape: f32[32,32], index: 3, kind: input, shape index: {}]
  %s4 = inlined_call_operand.vmem [shape: f32[32,1], index: 4, kind: input, shape index: {}]
  %s5 = inlined_call_operand.vmem [shape: f32[32,1], index: 5, kind: input, shape index: {}]
  %s6 = inlined_call_operand.<no memory space> [shape: f32[1,1], index: 6, kind: input, shape index: {}]
  %s7 = inlined_call_operand.hbm [shape: f32[1,128], index: 7, kind: output, shape index: {}]
  %s8 = sld [smem:[#allocation0]]
  $region38: #{tpu_custom_call.1} parent=0
    _
  %s10 = ssub.s32 1, %s8
  %s11 = scalar_select 0, %s10, %s8
  %v12 = vstv %s6
  %13 = vst [vmem:[#allocation2] sm:$0x1] %v12
  $region1: #{tpu_custom_call.1} parent=0
    #allocation3 [shape = 'u8[512]{0}', space=vmem, size = 0x400, scoped, tag = 'output window, operand 0, single buffered']
    #allocation4 [shape = 's32[1]{0}', space=sflag, size = 0x4, scoped, tag = 'scoped memory for tpu_custom_call.1']
    %14 = vsyncpa [#allocation4], 0
    // Predicated region
    $region2: #{tpu_custom_call.1} parent=1 // pred_check
      _
    $region3: #{tpu_custom_call.1} parent=1 // pred_check_branch
      %16 = sbr.rel (0) target = $region5
    $region4: #{tpu_custom_call.1} parent=1 // pred_region
      _
    $region5: #{tpu_custom_call.1} parent=1 // pred_fallthru
      _
    // Predicated region
    $region6: #{tpu_custom_call.1} parent=1 // pred_check
      _
    $region7: #{tpu_custom_call.1} parent=1 // pred_check_branch
      %18 = sbr.rel (0) target = $region9
    $region8: #{tpu_custom_call.1} parent=1 // pred_region
      _
    $region9: #{tpu_custom_call.1} parent=1 // pred_fallthru
      _
    // Predicated region
    $region10: #{tpu_custom_call.1} parent=1 // pred_check
      _
    $region11: #{tpu_custom_call.1} parent=1 // pred_check_branch
      %20 = sbr.rel (0) target = $region13
    $region12: #{tpu_custom_call.1} parent=1 // pred_region
      _
    $region13: #{tpu_custom_call.1} parent=1 // pred_fallthru
      _
    // Predicated region
    $region14: #{tpu_custom_call.1} parent=1 // pred_check
      _
    $region15: #{tpu_custom_call.1} parent=1 // pred_check_branch
      %22 = sbr.rel (0) target = $region17
    $region16: #{tpu_custom_call.1} parent=1 // pred_region
      _
    $region17: #{tpu_custom_call.1} parent=1 // pred_fallthru
      _
    // Predicated region
    $region18: #{tpu_custom_call.1} parent=1 // pred_check
      _
    $region19: #{tpu_custom_call.1} parent=1 // pred_check_branch
      %24 = sbr.rel (0) target = $region21
    $region20: #{tpu_custom_call.1} parent=1 // pred_region
      _
    $region21: #{tpu_custom_call.1} parent=1 // pred_fallthru
      _
    // Predicated region
    $region22: #{tpu_custom_call.1} parent=1 // pred_check
      _
    $region23: #{tpu_custom_call.1} parent=1 // pred_check_branch
      %26 = sbr.rel (0) target = $region25
    $region24: #{tpu_custom_call.1} parent=1 // pred_region
      _
    $region25: #{tpu_custom_call.1} parent=1 // pred_fallthru
      _
    // Predicated region
    $region26: #{tpu_custom_call.1} parent=1 // pred_check
      _
    $region27: #{tpu_custom_call.1} parent=1 // pred_check_branch
      %28 = sbr.rel (0) target = $region29
    $region28: #{tpu_custom_call.1} parent=1 // pred_region
      _
    $region29: #{tpu_custom_call.1} parent=1 // pred_fallthru
      _
    %v29 = vld [vmem:[%s1] sm:$0xff]
    %v30 = vld [vmem:[%s1 + $0x8] sm:$0xff]
    %v31 = vld [vmem:[%s1 + $0x10] sm:$0xff]
    %v32 = vld [vmem:[%s1 + $0x18] sm:$0xff]
    %v33 = vld [vmem:[%s0] sm:$0xff]
    %v34 = vld [vmem:[%s0 + $0x8] sm:$0xff]
    %v35 = vld [vmem:[%s0 + $0x10] sm:$0xff]
    %v36 = vld [vmem:[%s2] sm:$0xff]
    %v37 = vld [vmem:[%s2 + $0x8] sm:$0xff]
    %v38 = vld [vmem:[%s2 + $0x10] sm:$0xff]
    %v39 = vld [vmem:[%s2 + $0x18] sm:$0xff]
    %41 = vset.pattern.permute.xlu0 0
    %42 = vperm.xlu0 %41, %v36
    %v43 = vpop.permute.xlu0 %42
    %46 = vset.pattern.permute.xlu0 0
    %47 = vperm.xlu0 %46, %v37
    %v48 = vpop.permute.xlu0 %47
    %51 = vset.pattern.permute.xlu0 0
    %52 = vperm.xlu0 %51, %v38
    %v53 = vpop.permute.xlu0 %52
    %56 = vset.pattern.permute.xlu0 0
    %57 = vperm.xlu0 %56, %v39
    %v58 = vpop.permute.xlu0 %57
    %vm60 = vcmask 195584
    %v62 = vsel %vm60, %v29, 0
    %v65 = vsel %vm60, %v30, 0
    %v68 = vsel %vm60, %v31, 0
    %v71 = vsel %vm60, %v32, 0
    %73 = vmatprep.subr.mxu0 0.0
    %74 = vmatpush1.msra.mxu0 0.0
    %75 = vmatprep.subr.mxu0 0.0
    %76 = vmatpush1.msra.mxu0 0.0
    %77 = vmatprep.subr.mxu0 0.0
    %78 = vmatpush1.msra.mxu0 0.0
    %79 = vmatprep.subr.mxu0 0.0
    %80 = vmatpush1.msra.mxu0 0.0
    %81 = vmatprep.subr.mxu0 0.0
    %82 = vmatpush1.msra.mxu0 0.0
    %83 = vmatprep.subr.mxu0 0.0
    %84 = vmatpush1.msra.mxu0 0.0
    %85 = vmatprep.subr.mxu0 0.0
    %86 = vmatpush1.msra.mxu0 0.0
    %87 = vmatprep.subr.mxu0 0.0
    %88 = vmatpush1.msra.mxu0 0.0
    %89 = vmatprep.subr.mxu0 0.0
    %90 = vmatpush1.msra.mxu0 0.0
    %91 = vmatprep.subr.mxu0 0.0
    %92 = vmatpush1.msra.mxu0 0.0
    %93 = vmatprep.subr.mxu0 0.0
    %94 = vmatpush1.msra.mxu0 0.0
    %95 = vmatprep.subr.mxu0 0.0
    %96 = vmatpush1.msra.mxu0 0.0
    %97 = vmatprep.subr.mxu0 0.0
    %98 = vmatpush1.msra.mxu0 0.0
    %99 = vmatprep.subr.mxu0 0.0
    %100 = vmatpush1.msra.mxu0 %v35
    %101 = vmatprep.subr.mxu0 0.0
    %102 = vmatpush1.msra.mxu0 %v34
    %103 = vmatprep.subr.mxu0 0.0
    %104 = vmatpush1.msra.mxu0 %v33
    %105 = vmatprep.subr.mxu0 0.0
    %106 = vmatpush2.msra.mxu0 0.0
    %107 = vmatprep.subr.mxu0 0.0
    %108 = vmatpush2.msra.mxu0 0.0
    %109 = vmatprep.subr.mxu0 0.0
    %110 = vmatpush2.msra.mxu0 0.0
    %111 = vmatprep.subr.mxu0 0.0
    %112 = vmatpush2.msra.mxu0 0.0
    %113 = vmatprep.subr.mxu0 0.0
    %114 = vmatpush2.msra.mxu0 0.0
    %115 = vmatprep.subr.mxu0 0.0
    %116 = vmatpush2.msra.mxu0 0.0
    %117 = vmatprep.subr.mxu0 0.0
    %118 = vmatpush2.msra.mxu0 0.0
    %119 = vmatprep.subr.mxu0 0.0
    %120 = vmatpush2.msra.mxu0 0.0
    %121 = vmatprep.subr.mxu0 0.0
    %122 = vmatpush2.msra.mxu0 0.0
    %123 = vmatprep.subr.mxu0 0.0
    %124 = vmatpush2.msra.mxu0 0.0
    %125 = vmatprep.subr.mxu0 0.0
    %126 = vmatpush2.msra.mxu0 0.0
    %127 = vmatprep.subr.mxu0 0.0
    %128 = vmatpush2.msra.mxu0 0.0
    %129 = vmatprep.subr.mxu0 0.0
    %130 = vmatpush2.msra.mxu0 0.0
    %131 = vmatprep.subr.mxu0 0.0
    %132 = vmatpush2.msra.mxu0 0.0
    %133 = vmatprep.subr.mxu0 0.0
    %134 = vmatpush2.msra.mxu0 0.0
    %135 = vmatprep.subr.mxu0 0.0
    %136 = vmatpush2.msra.mxu0 0.0
    %137 = vmatprep.mubr.f32.mxu0 0.0
    %138 = vmatmul.mubr.f32.gmra.mxu0 %v62
    %v139 = vpop.f32.mrf.mxu0
    %v140 = vadd.f32 %v43, %v139
    %v141 = vpop.f32.mrf.mxu0
    %142 = vmatprep.mubr.f32.mxu0 0.0
    %143 = vmatmul.mubr.f32.gmra.mxu0 %v65
    %v144 = vpop.f32.mrf.mxu0
    %v145 = vadd.f32 %v48, %v144
    %v146 = vpop.f32.mrf.mxu0
    %147 = vmatprep.mubr.f32.mxu0 0.0
    %148 = vmatmul.mubr.f32.gmra.mxu0 %v68
    %v149 = vpop.f32.mrf.mxu0
    %v150 = vadd.f32 %v53, %v149
    %v151 = vpop.f32.mrf.mxu0
    %152 = vmatprep.mubr.f32.mxu0 0.0
    %153 = vmatmul.mubr.f32.gmra.mxu0 %v71
    %v154 = vpop.f32.mrf.mxu0
    %v155 = vadd.f32 %v58, %v154
    %v156 = vpop.f32.mrf.mxu0
    %157 = vdwg.mxu0
    %v158 = vmax.f32 %v140, 0.0
    %v159 = vmax.f32 %v145, 0.0
    %v160 = vmax.f32 %v150, 0.0
    %v161 = vmax.f32 %v155, 0.0
    %v162 = vld [vmem:[%s3] sm:$0xff]
    %v163 = vld [vmem:[%s3 + $0x8] sm:$0xff]
    %v164 = vld [vmem:[%s3 + $0x10] sm:$0xff]
    %v165 = vld [vmem:[%s3 + $0x18] sm:$0xff]
    %v166 = vld [vmem:[%s4] sm:$0xff]
    %v167 = vld [vmem:[%s4 + $0x8] sm:$0xff]
    %v168 = vld [vmem:[%s4 + $0x10] sm:$0xff]
    %v169 = vld [vmem:[%s4 + $0x18] sm:$0xff]
    %171 = vset.pattern.permute.xlu0 0
    %172 = vperm.xlu0 %171, %v166
    %v173 = vpop.permute.xlu0 %172
    %176 = vset.pattern.permute.xlu0 0
    %177 = vperm.xlu0 %176, %v167
    %v178 = vpop.permute.xlu0 %177
    %181 = vset.pattern.permute.xlu0 0
    %182 = vperm.xlu0 %181, %v168
    %v183 = vpop.permute.xlu0 %182
    %186 = vset.pattern.permute.xlu0 0
    %187 = vperm.xlu0 %186, %v169
    %v188 = vpop.permute.xlu0 %187
    %vm190 = vcmask 261120
    %v192 = vsel %vm190, %v162, 0
    %v195 = vsel %vm190, %v163, 0
    %v198 = vsel %vm190, %v164, 0
    %v201 = vsel %vm190, %v165, 0
    %203 = vmatprep.subr.mxu0 0.0
    %204 = vmatpush1.msra.mxu0 0.0
    %205 = vmatprep.subr.mxu0 0.0
    %206 = vmatpush1.msra.mxu0 0.0
    %207 = vmatprep.subr.mxu0 0.0
    %208 = vmatpush1.msra.mxu0 0.0
    %209 = vmatprep.subr.mxu0 0.0
    %210 = vmatpush1.msra.mxu0 0.0
    %211 = vmatprep.subr.mxu0 0.0
    %212 = vmatpush1.msra.mxu0 0.0
    %213 = vmatprep.subr.mxu0 0.0
    %214 = vmatpush1.msra.mxu0 0.0
    %215 = vmatprep.subr.mxu0 0.0
    %216 = vmatpush1.msra.mxu0 0.0
    %217 = vmatprep.subr.mxu0 0.0
    %218 = vmatpush1.msra.mxu0 0.0
    %219 = vmatprep.subr.mxu0 0.0
    %220 = vmatpush1.msra.mxu0 0.0
    %221 = vmatprep.subr.mxu0 0.0
    %222 = vmatpush1.msra.mxu0 0.0
    %223 = vmatprep.subr.mxu0 0.0
    %224 = vmatpush1.msra.mxu0 0.0
    %225 = vmatprep.subr.mxu0 0.0
    %226 = vmatpush1.msra.mxu0 0.0
    %227 = vmatprep.subr.mxu0 0.0
    %228 = vmatpush1.msra.mxu0 %v161
    %229 = vmatprep.subr.mxu0 0.0
    %230 = vmatpush1.msra.mxu0 %v160
    %231 = vmatprep.subr.mxu0 0.0
    %232 = vmatpush1.msra.mxu0 %v159
    %233 = vmatprep.subr.mxu0 0.0
    %234 = vmatpush1.msra.mxu0 %v158
    %235 = vmatprep.subr.mxu0 0.0
    %236 = vmatpush2.msra.mxu0 0.0
    %237 = vmatprep.subr.mxu0 0.0
    %238 = vmatpush2.msra.mxu0 0.0
    %239 = vmatprep.subr.mxu0 0.0
    %240 = vmatpush2.msra.mxu0 0.0
    %241 = vmatprep.subr.mxu0 0.0
    %242 = vmatpush2.msra.mxu0 0.0
    %243 = vmatprep.subr.mxu0 0.0
    %244 = vmatpush2.msra.mxu0 0.0
    %245 = vmatprep.subr.mxu0 0.0
    %246 = vmatpush2.msra.mxu0 0.0
    %247 = vmatprep.subr.mxu0 0.0
    %248 = vmatpush2.msra.mxu0 0.0
    %249 = vmatprep.subr.mxu0 0.0
    %250 = vmatpush2.msra.mxu0 0.0
    %251 = vmatprep.subr.mxu0 0.0
    %252 = vmatpush2.msra.mxu0 0.0
    %253 = vmatprep.subr.mxu0 0.0
    %254 = vmatpush2.msra.mxu0 0.0
    %255 = vmatprep.subr.mxu0 0.0
    %256 = vmatpush2.msra.mxu0 0.0
    %257 = vmatprep.subr.mxu0 0.0
    %258 = vmatpush2.msra.mxu0 0.0
    %259 = vmatprep.subr.mxu0 0.0
    %260 = vmatpush2.msra.mxu0 0.0
    %261 = vmatprep.subr.mxu0 0.0
    %262 = vmatpush2.msra.mxu0 0.0
    %263 = vmatprep.subr.mxu0 0.0
    %264 = vmatpush2.msra.mxu0 0.0
    %265 = vmatprep.subr.mxu0 0.0
    %266 = vmatpush2.msra.mxu0 0.0
    %267 = vmatprep.mubr.f32.mxu0 0.0
    %268 = vmatmul.mubr.f32.gmra.mxu0 %v192
    %v269 = vpop.f32.mrf.mxu0
    %v270 = vadd.f32 %v173, %v269
    %v271 = vpop.f32.mrf.mxu0
    %272 = vmatprep.mubr.f32.mxu0 0.0
    %273 = vmatmul.mubr.f32.gmra.mxu0 %v195
    %v274 = vpop.f32.mrf.mxu0
    %v275 = vadd.f32 %v178, %v274
    %v276 = vpop.f32.mrf.mxu0
    %277 = vmatprep.mubr.f32.mxu0 0.0
    %278 = vmatmul.mubr.f32.gmra.mxu0 %v198
    %v279 = vpop.f32.mrf.mxu0
    %v280 = vadd.f32 %v183, %v279
    %v281 = vpop.f32.mrf.mxu0
    %282 = vmatprep.mubr.f32.mxu0 0.0
    %283 = vmatmul.mubr.f32.gmra.mxu0 %v201
    %v284 = vpop.f32.mrf.mxu0
    %v285 = vadd.f32 %v188, %v284
    %v286 = vpop.f32.mrf.mxu0
    %287 = vdwg.mxu0
    %v288 = vmax.f32 %v270, 0.0
    %v289 = vmax.f32 %v275, 0.0
    %v290 = vmax.f32 %v280, 0.0
    %v291 = vmax.f32 %v285, 0.0
    %v292 = vld [vmem:[%s5] sm:$0xff]
    %v293 = vld [vmem:[%s5 + $0x8] sm:$0xff]
    %v294 = vld [vmem:[%s5 + $0x10] sm:$0xff]
    %v295 = vld [vmem:[%s5 + $0x18] sm:$0xff]
    %297 = vset.pattern.permute.xlu0 0
    %298 = vperm.xlu0 %297, %v292
    %v299 = vpop.permute.xlu0 %298
    %302 = vset.pattern.permute.xlu0 0
    %303 = vperm.xlu0 %302, %v293
    %v304 = vpop.permute.xlu0 %303
    %307 = vset.pattern.permute.xlu0 0
    %308 = vperm.xlu0 %307, %v294
    %v309 = vpop.permute.xlu0 %308
    %312 = vset.pattern.permute.xlu0 0
    %313 = vperm.xlu0 %312, %v295
    %v314 = vpop.permute.xlu0 %313
    %v316 = vmul.f32 %v299, %v288
    %v317 = vmul.f32 %v304, %v289
    %v318 = vmul.f32 %v309, %v290
    %v319 = vmul.f32 %v314, %v291
    %v320 = vadd.f32 %v316, %v317
    %v321 = vadd.f32 %v320, %v318
    %v322 = vadd.f32 %v321, %v319
    %v323 = vrot.slane %v322, 4
    %v324 = vadd.f32 %v322, %v323
    %v325 = vrot.slane %v324, 2
    %v326 = vadd.f32 %v324, %v325
    %v327 = vrot.slane %v326, 1
    %v328 = vadd.f32 %v326, %v327
    %v329 = vld [vmem:[#allocation2] sm:$0x1]
    %331 = vset.pattern.permute.xlu0 0
    %332 = vperm.xlu0 %331, %v329
    %v333 = vpop.permute.xlu0 %332
    %v335 = vlaneseq
    %v336 = vshrl.u32 %v335, 7
    %v337 = vsub.s32 0, %v336
    %v338 = vrot.slane %v333, %v337
    %v339 = vadd.f32 %v328, %v338
    %340 = vst [vmem:[#allocation3] sm:$0x1] %v339
    // Predicated region
    $region30: #{tpu_custom_call.1} parent=1 // pred_check
      _
    $region31: #{tpu_custom_call.1} parent=1 // pred_check_branch
      %342 = sbr.rel (0) target = $region33
    $region32: #{tpu_custom_call.1} parent=1 // pred_region
      %s344 = ssub.s32 16, 16
      %345 = vsyncadd [#allocation4], %s344
      %s347 = sshll.u32 [#allocation3], 4
      %s348 = int_to_ptr.vmem [resolvable:$true] %s347
      %350 = dma.vmem_to_hbm [thread:$0]  %s348, 16, %s7, [#allocation4]
    $region33: #{tpu_custom_call.1} parent=1 // pred_fallthru
      _
    // Predicated region
    $region34: #{tpu_custom_call.1} parent=1 // pred_check
      _
    $region35: #{tpu_custom_call.1} parent=1 // pred_check_branch
      %352 = sbr.rel (0) target = $region37
    $region36: #{tpu_custom_call.1} parent=1 // pred_region
      %353 = dma.done [#allocation4], 16
    $region37: #{tpu_custom_call.1} parent=1 // pred_fallthru
      _
    %354 = vsyncpa [#allocation4], 1

</llo_original>
